<compile_context>
chip_gen: v6e
topology: v6e:2x2x1
jax: 0.10.0
libtpu: 0.0.40
codegen_flags: <defaults>
</compile_context>

<pallas_src>
import functools

import jax
import jax.numpy as jnp
from jax.experimental import pallas as pl
from jax.experimental.pallas import tpu as pltpu

_MIB = 1024 * 1024


# ----------------------------------------------------------------------------
# VMEM budget helpers (generation aware)
# ----------------------------------------------------------------------------
def _vmem_capacity_bytes():
    """Physical per-core VMEM (v5e/v6e: 128 MiB, v7x: 64 MiB)."""
    try:
        info = pltpu.get_tpu_info()
        for name in ("vmem_capacity_bytes", "vmem_size_bytes", "vmem_bytes"):
            cap = getattr(info, name, None)
            if cap:
                return int(cap)
    except Exception:
        pass
    return 64 * _MIB  # conservative fallback (most restrictive generation)


def _vmem_limit_bytes(cap):
    # ~75% of physical: v7x -> 48 MiB, v5e/v6e -> 96 MiB; leaves headroom for
    # compiler-internal scratch while unlocking big, roofline-friendly tiles.
    return int(cap * 3 // 4)


def _round_up8(n):
    return ((n + 7) // 8) * 8


def _want_parallel_blocks(n):
    # Ensure the "parallel" batch axis has several blocks so v7x's 2 TCs both
    # get work (harmless ~0.35 us/step extra on single-TC v5e/v6e).
    if n >= 64:
        return 4
    if n >= 16:
        return 2
    return 1


def _batch_tile(n, row_bytes, budget, min_blocks):
    """Tile size along a batch-like 'parallel' axis (multiple of 8, or n if n<=8)."""
    if n <= 8:
        return n
    tb = _round_up8(pl.cdiv(n, max(min_blocks, 1)))
    tb = min(tb, 1024, max(8, (n // 8) * 8))
    while tb > 8 and tb * row_bytes > budget:
        tb = max(8, _round_up8(tb // 2))
    return max(8, (tb // 8) * 8)


def _pool_tiles(B, S, F, itemsize, x_budget):
    """(tb, ts) for the pooled path: shrink ts (reduction chunk) before tb."""
    min_set = min(S, 8)
    tb = _batch_tile(B, min_set * F * itemsize, x_budget, _want_parallel_blocks(B))
    row_bytes = tb * F * itemsize
    ts_cap = max(1, x_budget // max(row_bytes, 1))
    if S <= 8 or S <= ts_cap:
        ts = S                              # full set dim: single reduction step
    else:
        ts = max(8, (min(ts_cap, S) // 8) * 8)
    return tb, ts


# ----------------------------------------------------------------------------
# Kernels
# ----------------------------------------------------------------------------
def _pool_proj_kernel(x_ref, w_ref, b_ref, o_ref, acc_ref, *,
                      set_len, scale, mask_last):
    """Fused set-pooling (sum/mean over set axis) + Linear + ReLU.

    x_ref:   (tb, ts, F)  tile of X
    w_ref:   (F, Dout)    out_proj weight stored [in, out]
    b_ref:   (1, Dout)    bias
    o_ref:   (tb, Dout)   output tile (resident across the set-axis grid)
    acc_ref: (tb, F) f32  pooled accumulator scratch
    """
    ks = pl.program_id(1)

    @pl.when(ks == 0)
    def _():
        acc_ref[...] = jnp.zeros_like(acc_ref)

    x = x_ref[...].astype(jnp.float32)
    if mask_last:
        # Partial set-axis tile: zero rows whose global set index >= set_len
        # (no host-side padding -> those rows contain garbage).
        ts = x_ref.shape[1]
        idx = jax.lax.broadcasted_iota(jnp.int32, (1, ts, 1), 1) + ks * ts
        x = jnp.where(idx < set_len, x, 0.0)

    # Partial reduction over this set-axis tile (XLU sublane reduce, f32 acc).
    acc_ref[...] += jnp.sum(x, axis=-2)

    @pl.when(ks == pl.num_programs(1) - 1)
    def _():
        pooled = acc_ref[...]
        if scale is not None:               # statically skipped for agg='sum'
            pooled = pooled * scale
        z = jnp.dot(pooled.astype(w_ref.dtype), w_ref[...],
                    preferred_element_type=jnp.float32)
        z = z + b_ref[...].astype(jnp.float32)
        o_ref[...] = jnp.maximum(z, 0.0).astype(o_ref.dtype)   # ReLU, fused


def _linear_relu_kernel(x_ref, w_ref, b_ref, o_ref):
    """walk_linear_out path: per-row Linear + ReLU on a (rows, Dout-tile) block."""
    z = jnp.dot(x_ref[...], w_ref[...], preferred_element_type=jnp.float32)
    z = z + b_ref[...].astype(jnp.float32)
    o_ref[...] = jnp.maximum(z, 0.0).astype(o_ref.dtype)


# ----------------------------------------------------------------------------
# Wrappers
# ----------------------------------------------------------------------------
def _linear_relu(x2d, w, b, *, block_n=None):
    """y = relu(x2d @ w + b); ragged N handled by cdiv grid + masked stores."""
    N, F = x2d.shape
    Dout = w.shape[1]
    itemsize = x2d.dtype.itemsize
    w_itemsize = w.dtype.itemsize

    vmem_limit = _vmem_limit_bytes(_vmem_capacity_bytes())
    x_budget = vmem_limit // 4          # X is double-buffered -> <= half the limit
    w_budget = vmem_limit // 8

    if block_n is None:
        tn = _batch_tile(N, F * itemsize, x_budget, _want_parallel_blocks(N))
    else:
        tn = N if N <= 8 else max(8, (min(_round_up8(block_n), N) // 8) * 8)

    # Tile the weight over Dout only when it is too big to co-reside with the
    # double-buffered X pipeline.
    if F * Dout * w_itemsize <= w_budget or Dout < 256:
        td = Dout
    else:
        td = max(128, (w_budget // (F * w_itemsize)) // 128 * 128)
        td = min(td, Dout)

    grid = (pl.cdiv(N, tn), pl.cdiv(Dout, td))   # Dout innermost: X DMA elided
    b2d = b.reshape(1, Dout)

    cost = pl.CostEstimate(
        flops=int(2.0 * N * F * Dout),
        transcendentals=0,
        bytes_accessed=int(N * F * itemsize
                           + grid[0] * F * Dout * w_itemsize
                           + N * Dout * itemsize),
    )

    return pl.pallas_call(
        _linear_relu_kernel,
        out_shape=jax.ShapeDtypeStruct((N, Dout), x2d.dtype),
        grid_spec=pltpu.PrefetchScalarGridSpec(
            num_scalar_prefetch=0,
            grid=grid,
            in_specs=[
                pl.BlockSpec((tn, F), lambda i, j: (i, 0)),
                pl.BlockSpec((F, td), lambda i, j: (0, j)),
                pl.BlockSpec((1, td), lambda i, j: (0, j)),
            ],
            out_specs=pl.BlockSpec((tn, td), lambda i, j: (i, j)),
        ),
        compiler_params=pltpu.CompilerParams(
            dimension_semantics=("parallel", "parallel"),
            vmem_limit_bytes=vmem_limit),
        cost_estimate=cost,
    )(x2d, w, b2d)


def set_pooler_forward(X, w_out, b_out, *, agg="sum", walk_linear_out=False,
                       block_b=None, block_s=None):
    """Pallas implementation of SetPooler.forward (inference).

    X:     (B, S, F)  set of per-element features
    w_out: (F, Dout)  out_proj weight stored [in, out] (transposed vs nn.Linear)
    b_out: (Dout,)
    Returns (B, Dout) for agg in {'sum','mean'}, or (B, S, Dout) if walk_linear_out.
    """
    # TODO(synk): Dropout inside out_proj is identity at inference; training-mode
    # stochastic masking is not implemented in this kernel.
    B, S, F = X.shape
    Dout = w_out.shape[1]

    if walk_linear_out:
        y2d = _linear_relu(X.reshape(B * S, F), w_out, b_out, block_n=block_b)
        return y2d.reshape(B, S, Dout)

    assert agg in ("sum", "mean")
    scale = None if agg == "sum" else 1.0 / S   # mean divides by the ORIGINAL S

    itemsize = X.dtype.itemsize
    vmem_limit = _vmem_limit_bytes(_vmem_capacity_bytes())
    x_budget = vmem_limit // 4                  # X double-buffered

    tb, ts = _pool_tiles(B, S, F, itemsize, x_budget)
    if block_b is not None:
        tb = B if B <= 8 else max(8, (min(_round_up8(block_b), B) // 8) * 8)
    if block_s is not None:
        bs = min(block_s, S)
        ts = S if (bs >= S or S <= 8) else max(8, (bs // 8) * 8)

    grid = (pl.cdiv(B, tb), pl.cdiv(S, ts))     # reduction axis last
    mask_last = (S % ts) != 0

    b2d = b_out.reshape(1, Dout)
    cost = pl.CostEstimate(
        flops=int(2.0 * B * S * F + 2.0 * B * F * Dout),
        transcendentals=0,
        bytes_accessed=int(B * S * F * itemsize
                           + w_out.size * w_out.dtype.itemsize
                           + B * Dout * itemsize),
    )

    kernel = functools.partial(_pool_proj_kernel, set_len=S, scale=scale,
                               mask_last=mask_last)

    return pl.pallas_call(
        kernel,
        out_shape=jax.ShapeDtypeStruct((B, Dout), X.dtype),
        grid_spec=pltpu.PrefetchScalarGridSpec(
            num_scalar_prefetch=0,
            grid=grid,
            in_specs=[
                pl.BlockSpec((tb, ts, F), lambda i, k: (i, k, 0)),
                pl.BlockSpec((F, Dout), lambda i, k: (0, 0)),   # grid-invariant
                pl.BlockSpec((1, Dout), lambda i, k: (0, 0)),   # grid-invariant
            ],
            out_specs=pl.BlockSpec((tb, Dout), lambda i, k: (i, 0)),
            scratch_shapes=[pltpu.VMEM((tb, F), jnp.float32)],
        ),
        compiler_params=pltpu.CompilerParams(
            dimension_semantics=("parallel", "arbitrary"),
            vmem_limit_bytes=vmem_limit),
        cost_estimate=cost,
    )(X, w_out, b2d)


def init_set_pooler_params(key, n_features, out_features, dtype=jnp.float32):
    """Mirror torch.nn.Linear default init (uniform +-1/sqrt(fan_in)) for the
    only parameters used in forward (out_proj); weights stored as [in, out]."""
    kw, kb = jax.random.split(key)
    lim = 1.0 / jnp.sqrt(n_features)
    w = jax.random.uniform(kw, (n_features, out_features), dtype, -lim, lim)
    b = jax.random.uniform(kb, (out_features,), dtype, -lim, lim)
    return w, b


# ----------------------------------------------------------------------------
# Demo / correctness check
# ----------------------------------------------------------------------------
if __name__ == "__main__":
    key = jax.random.PRNGKey(0)
    kx, kp = jax.random.split(key)

    # Ragged B and S on purpose: exercises partial batch blocks and the
    # in-kernel partial set-tile mask (no host-side padding anywhere).
    B, S, F, Dout = 13, 12, 32, 16
    X = jax.random.normal(kx, (B, S, F), jnp.float32)
    w, b = init_set_pooler_params(kp, F, Dout)

    # sum: forced (tb=8, ts=8) -> grid (2, 2) with a masked partial set tile.
    y_sum = set_pooler_forward(X, w, b, agg="sum", block_b=8, block_s=8)
    # mean: auto tiling -> full-set tile (ts=S), partial batch block.
    y_mean = set_pooler_forward(X, w, b, agg="mean")
    # walk path: per-element Linear+ReLU with auto N tiling.
    y_walk = set_pooler_forward(X, w, b, walk_linear_out=True)
    y_sum, y_mean, y_walk = jax.block_until_ready((y_sum, y_mean, y_walk))

    # Pure-JAX references.
    ref_sum = jnp.maximum(X.sum(axis=-2) @ w + b, 0.0)
    ref_mean = jnp.maximum(X.mean(axis=-2) @ w + b, 0.0)
    ref_walk = jnp.maximum(X @ w + b, 0.0)

    assert y_sum.shape == (B, Dout)
    assert y_mean.shape == (B, Dout)
    assert y_walk.shape == (B, S, Dout)
    assert jnp.allclose(y_sum, ref_sum, atol=1e-5, rtol=1e-5)
    assert jnp.allclose(y_mean, ref_mean, atol=1e-5, rtol=1e-5)
    assert jnp.allclose(y_walk, ref_walk, atol=1e-5, rtol=1e-5)

    print("KERNEL_OK")
</pallas_src>

<mosaic_0001>
module attributes {stable_mosaic.version = 11 : i64} {
  func.func @_pool_proj_kernel(%arg0: i32, %arg1: i32, %arg2: memref<8x8x32xf32, #tpu.memory_space<vmem>>, %arg3: memref<32x16xf32, #tpu.memory_space<vmem>>, %arg4: memref<1x16xf32, #tpu.memory_space<vmem>>, %arg5: memref<8x16xf32, #tpu.memory_space<vmem>>, %arg6: memref<8x32xf32, #tpu.memory_space<vmem>>) attributes {dimension_semantics = [#tpu.dimension_semantics<parallel>, #tpu.dimension_semantics<arbitrary>], iteration_bounds = array<i64: 2, 2>, scalar_prefetch = 0 : i64, scratch_operands = 1 : i64, tpu.core_type = #tpu.core_type<tc>, window_params = [{transform_indices = @transform_0, window_bounds = array<i64: 8, 8, 32>}, {pipeline_mode = #tpu.pipeline_mode<synchronous>, transform_indices = @transform_1, window_bounds = array<i64: 32, 16>}, {pipeline_mode = #tpu.pipeline_mode<synchronous>, transform_indices = @transform_2, window_bounds = array<i64: 1, 16>}, {transform_indices = @transform_3, window_bounds = array<i64: 8, 16>}]} {
    %c0_i32 = arith.constant 0 : i32
    %0 = arith.cmpi eq, %arg1, %c0_i32 : i32
    %1 = arith.extui %0 : i1 to i32
    %c0_i32_0 = arith.constant 0 : i32
    %2 = arith.cmpi ne, %1, %c0_i32_0 : i32
    scf.if %2 {
      %cst_9 = arith.constant 0.000000e+00 : f32
      %21 = vector.broadcast %cst_9 : f32 to vector<8x32xf32>
      %c0_10 = arith.constant 0 : index
      %c0_11 = arith.constant 0 : index
      %22 = vector.load %arg6[%c0_10, %c0_11] : memref<8x32xf32, #tpu.memory_space<vmem>>, vector<8x32xf32>
      tpu.vector_store %arg6[%c0_10, %c0_11], %21 {strides = array<i32>} : memref<8x32xf32, #tpu.memory_space<vmem>>, vector<8x32xf32>,
    } else {
    }
    %c0 = arith.constant 0 : index
    %c0_1 = arith.constant 0 : index
    %c0_2 = arith.constant 0 : index
    %3 = vector.load %arg2[%c0, %c0_1, %c0_2] : memref<8x8x32xf32, #tpu.memory_space<vmem>>, vector<8x8x32xf32>
    %4 = tpu.iota {dimensions = array<i32: 1>} : vector<1x8x1xi32>
    %c8_i32 = arith.constant 8 : i32
    %5 = arith.muli %arg1, %c8_i32 : i32
    %6 = vector.broadcast %5 : i32 to vector<1x8x1xi32>
    %7 = arith.addi %4, %6 : vector<1x8x1xi32>
    %c12_i32 = arith.constant 12 : i32
    %8 = vector.broadcast %c12_i32 : i32 to vector<1x8x1xi32>
    %9 = arith.cmpi slt, %7, %8 : vector<1x8x1xi32>
    %cst = arith.constant 0.000000e+00 : f32
    %10 = vector.shape_cast %9 : vector<1x8x1xi1> to vector<1x8x1xi1>
    %11 = vector.broadcast %10 : vector<1x8x1xi1> to vector<8x8x32xi1>
    %12 = vector.broadcast %cst : f32 to vector<8x8x32xf32>
    %13 = arith.select %11, %3, %12 : vector<8x8x32xi1>, vector<8x8x32xf32>
    %c0_3 = arith.constant 0 : index
    %c0_4 = arith.constant 0 : index
    %14 = vector.load %arg6[%c0_3, %c0_4] : memref<8x32xf32, #tpu.memory_space<vmem>>, vector<8x32xf32>
    %cst_5 = arith.constant dense<0.000000e+00> : vector<8x32xf32>
    %15 = vector.multi_reduction <add>, %13, %cst_5 [1] : vector<8x8x32xf32> to vector<8x32xf32>
    %16 = arith.addf %14, %15 : vector<8x32xf32>
    %c0_6 = arith.constant 0 : index
    %c0_7 = arith.constant 0 : index
    %17 = vector.load %arg6[%c0_6, %c0_7] : memref<8x32xf32, #tpu.memory_space<vmem>>, vector<8x32xf32>
    tpu.vector_store %arg6[%c0_6, %c0_7], %16 {strides = array<i32>} : memref<8x32xf32, #tpu.memory_space<vmem>>, vector<8x32xf32>,
    %c1_i32 = arith.constant 1 : i32
    %18 = arith.cmpi eq, %arg1, %c1_i32 : i32
    %19 = arith.extui %18 : i1 to i32
    %c0_i32_8 = arith.constant 0 : i32
    %20 = arith.cmpi ne, %19, %c0_i32_8 : i32
    scf.if %20 {
      %c0_9 = arith.constant 0 : index
      %c0_10 = arith.constant 0 : index
      %21 = vector.load %arg6[%c0_9, %c0_10] : memref<8x32xf32, #tpu.memory_space<vmem>>, vector<8x32xf32>
      %c0_11 = arith.constant 0 : index
      %c0_12 = arith.constant 0 : index
      %22 = vector.load %arg3[%c0_11, %c0_12] : memref<32x16xf32, #tpu.memory_space<vmem>>, vector<32x16xf32>
      %cst_13 = arith.constant dense<0.000000e+00> : vector<8x16xf32>
      %23 = tpu.matmul %21, %22, %cst_13 {dimension_numbers = #tpu.dot_dimension_numbers<[1], [0], [0], [1], [0, 0, 1, 1], [], []>} : vector<8x32xf32>, vector<32x16xf32>, vector<8x16xf32> -> vector<8x16xf32>
      %c0_14 = arith.constant 0 : index
      %c0_15 = arith.constant 0 : index
      %24 = vector.load %arg4[%c0_14, %c0_15] : memref<1x16xf32, #tpu.memory_space<vmem>>, vector<1x16xf32>
      %25 = vector.broadcast %24 : vector<1x16xf32> to vector<8x16xf32>
      %26 = arith.addf %23, %25 : vector<8x16xf32>
      %cst_16 = arith.constant 0.000000e+00 : f32
      %27 = vector.broadcast %cst_16 : f32 to vector<8x16xf32>
      %28 = arith.maximumf %26, %27 : vector<8x16xf32>
      %c0_17 = arith.constant 0 : index
      %c0_18 = arith.constant 0 : index
      %29 = vector.load %arg5[%c0_17, %c0_18] : memref<8x16xf32, #tpu.memory_space<vmem>>, vector<8x16xf32>
      tpu.vector_store %arg5[%c0_17, %c0_18], %28 {strides = array<i32>} : memref<8x16xf32, #tpu.memory_space<vmem>>, vector<8x16xf32>,
    } else {
    }
    return
  }
  func.func @transform_0(%arg0: i32, %arg1: i32) -> (i32, i32, i32) {
    %c0_i32 = arith.constant 0 : i32
    %c0_i32_0 = arith.constant 0 : i32
    return %arg0, %arg1, %c0_i32 : i32, i32, i32
  }
  func.func @transform_1(%arg0: i32, %arg1: i32) -> (i32, i32) {
    %c0_i32 = arith.constant 0 : i32
    %c0_i32_0 = arith.constant 0 : i32
    %c0_i32_1 = arith.constant 0 : i32
    return %c0_i32, %c0_i32_0 : i32, i32
  }
  func.func @transform_2(%arg0: i32, %arg1: i32) -> (i32, i32) {
    %c0_i32 = arith.constant 0 : i32
    %c0_i32_0 = arith.constant 0 : i32
    %c0_i32_1 = arith.constant 0 : i32
    return %c0_i32, %c0_i32_0 : i32, i32
  }
  func.func @transform_3(%arg0: i32, %arg1: i32) -> (i32, i32) {
    %c0_i32 = arith.constant 0 : i32
    %c0_i32_0 = arith.constant 0 : i32
    return %arg0, %c0_i32 : i32, i32
  }
}

</mosaic_0001>

<llo_original>
// kernel: tpu_custom_call.1
$region0: #{tpu_custom_call.1}
  #allocation0 [shape = 'u32[]', space=smem, size = 0x4, offset = 0x4, fixed_abs, tag = 'smem constant byte address 0x4 - core index']
  #allocation1 [shape = 'u32[144,128]{1,0:T(1,128)}', space=vmem, size = 0x12000, scoped, tag = 'internal scratch']
  #allocation2 [shape = 'f32[8,32]{1,0:T(8,128)}', space=vmem, size = 0x1000, scoped, tag = 'scratch operand']
  %s0 = inlined_call_operand.vmem [shape: f32[13,12,32], index: 0, kind: input, shape index: {}]
  %s1 = inlined_call_operand.vmem [shape: f32[32,16], index: 1, kind: input, shape index: {}]
  %s2 = inlined_call_operand.vmem [shape: f32[1,16], index: 2, kind: input, shape index: {}]
  %s3 = inlined_call_operand.hbm [shape: f32[13,16], index: 3, kind: output, shape index: {}]
  %s4 = sld [smem:[#allocation0]]
  $region105: #{tpu_custom_call.1} parent=0
    _
  %s6 = ssub.s32 1, %s4
  %s7 = scalar_select 0, %s6, %s4
  $region1: #{tpu_custom_call.1} parent=0
    #allocation3 [shape = 'u8[65536]{0}', space=vmem, size = 0x10000, scoped, tag = 'input window, operand 0']
    #allocation4 [shape = 'u8[8192]{0}', space=vmem, size = 0x2000, scoped, tag = 'output window, operand 0']
    #allocation5 [shape = 's32[2]{0}', space=sflag, size = 0x8, scoped, tag = 'scoped memory for tpu_custom_call.1']
    %8 = vsyncpa [#allocation5], 0
    %s9 = scalar_lea.sflag [#allocation5], 1
    %10 = vsyncpa %s9, 0
    loop: start=0, step=1, limit=6
    $region2: #{tpu_custom_call.1} parent=1 // loop_pre_header
      _
    $region3: #{tpu_custom_call.1} parent=1 // loop_header
      %s12 = sphi 0, %s16
      %p13 = scmp.ge.s32.totalorder %s12, 6
      %s19 = sphi 0, %s31
      %s20 = sphi 0, %s27
      %s21 = sphi 0, %s19
      %s22 = sphi 0, %s20
      %s23 = sphi 0, %s21
      %s24 = sphi 0, %s22
      %s36 = sphi 0, %s38
      %s39 = sphi 0, %s36
      %s40 = sphi 0, %s39
      %s56 = sphi 0, %s40
      %s60 = sphi 0, %s60
      %s62 = sphi 0, %s60
      %s63 = sphi 0, %s62
      %s77 = sphi 0, %s63
      %s81 = sphi 0, %s81
      %s83 = sphi 0, %s81
      %s84 = sphi 0, %s83
      %s98 = sphi 0, %s84
      %s104 = sphi 0, %s106
      %s107 = sphi 0, %s104
      %s108 = sphi 0, %s107
      %s124 = sphi 0, %s108
    $region4: #{tpu_custom_call.1} parent=1 // loop_header_branch
      %15 = sbr.rel (%p13) target = $region8
    $region5: #{tpu_custom_call.1} parent=1 // loop_body
      %s17 = ssub.s32 %s12, 1
      %s18 = ssub.s32 %s12, 2
      %s25 = sadd.s32 1, %s20
      %p26 = scmp.ge.s32.totalorder %s25, 2
      %s27 = scalar_select %p26, 0, %s25
      %s28 = sadd.s32 1, %s19
      %s29 = scalar_select %p26, %s28, %s19
      %p30 = scmp.ge.s32.totalorder %s29, 2
      %s31 = scalar_select %p30, 0, %s29
      %s32 = ssub.s32 %s19, %s31
      %s33 = ssub.s32 %s20, %s27
      %s34 = sor.u32 %s32, %s33
      %p35 = scmp.eq.s32.totalorder %s34, 0
      %s37 = sadd.s32 %s36, 1
      %s38 = scalar_select %p35, %s36, %s37
      %p41 = pneg %p35
      %p42 = scmp.eq.s32.totalorder %s12, 3
      %p43 = por %p41, %p42
      %p44 = scmp.ne.s32.totalorder %s36, %s39
      %p45 = scmp.eq.s32.totalorder %s12, 0
      %p46 = por %p44, %p45
      %p47 = scmp.ne.s32.totalorder %s36, %s39
      %p48 = scmp.eq.s32.totalorder %s17, 3
      %p49 = por %p47, %p48
      %p50 = scmp.ne.s32.totalorder %s39, %s40
      %p51 = scmp.eq.s32.totalorder %s17, 0
      %p52 = por %p50, %p51
      %p53 = scmp.ne.s32.totalorder %s39, %s40
      %p54 = scmp.eq.s32.totalorder %s18, 3
      %p55 = por %p53, %p54
      %p57 = scmp.ne.s32.totalorder %s40, %s56
      %p58 = scmp.eq.s32.totalorder %s18, 0
      %p59 = por %p57, %p58
      %s61 = sadd.s32 %s60, 1
      %p64 = scmp.eq.s32.totalorder %s12, 3
      %p65 = scmp.ne.s32.totalorder %s60, %s62
      %p66 = scmp.eq.s32.totalorder %s12, 0
      %p67 = por %p65, %p66
      %p68 = scmp.ne.s32.totalorder %s60, %s62
      %p69 = scmp.eq.s32.totalorder %s17, 3
      %p70 = por %p68, %p69
      %p71 = scmp.ne.s32.totalorder %s62, %s63
      %p72 = scmp.eq.s32.totalorder %s17, 0
      %p73 = por %p71, %p72
      %p74 = scmp.ne.s32.totalorder %s62, %s63
      %p75 = scmp.eq.s32.totalorder %s18, 3
      %p76 = por %p74, %p75
      %p78 = scmp.ne.s32.totalorder %s63, %s77
      %p79 = scmp.eq.s32.totalorder %s18, 0
      %p80 = por %p78, %p79
      %s82 = sadd.s32 %s81, 1
      %p85 = scmp.eq.s32.totalorder %s12, 3
      %p86 = scmp.ne.s32.totalorder %s81, %s83
      %p87 = scmp.eq.s32.totalorder %s12, 0
      %p88 = por %p86, %p87
      %p89 = scmp.ne.s32.totalorder %s81, %s83
      %p90 = scmp.eq.s32.totalorder %s17, 3
      %p91 = por %p89, %p90
      %p92 = scmp.ne.s32.totalorder %s83, %s84
      %p93 = scmp.eq.s32.totalorder %s17, 0
      %p94 = por %p92, %p93
      %p95 = scmp.ne.s32.totalorder %s83, %s84
      %p96 = scmp.eq.s32.totalorder %s18, 3
      %p97 = por %p95, %p96
      %p99 = scmp.ne.s32.totalorder %s84, %s98
      %p100 = scmp.eq.s32.totalorder %s18, 0
      %p101 = por %p99, %p100
      %s102 = ssub.s32 %s19, %s31
      %p103 = scmp.eq.s32.totalorder %s102, 0
      %s105 = sadd.s32 %s104, 1
      %s106 = scalar_select %p103, %s104, %s105
      %p109 = pneg %p103
      %p110 = scmp.eq.s32.totalorder %s12, 3
      %p111 = por %p109, %p110
      %p112 = scmp.ne.s32.totalorder %s104, %s107
      %p113 = scmp.eq.s32.totalorder %s12, 0
      %p114 = por %p112, %p113
      %p115 = scmp.ne.s32.totalorder %s104, %s107
      %p116 = scmp.eq.s32.totalorder %s17, 3
      %p117 = por %p115, %p116
      %p118 = scmp.ne.s32.totalorder %s107, %s108
      %p119 = scmp.eq.s32.totalorder %s17, 0
      %p120 = por %p118, %p119
      %p121 = scmp.ne.s32.totalorder %s107, %s108
      %p122 = scmp.eq.s32.totalorder %s18, 3
      %p123 = por %p121, %p122
      %p125 = scmp.ne.s32.totalorder %s108, %s124
      %p126 = scmp.eq.s32.totalorder %s18, 0
      %p127 = por %p125, %p126
      %p128 = scmp.le.s32.totalorder 1, %s12
      %p129 = scmp.lt.s32.totalorder %s12, 5
      %p130 = pnand %p128, %p129
      %p131 = pneg %p130
      // Predicated region
      $region9: #{tpu_custom_call.1} parent=5 // pred_check
        _
      $region10: #{tpu_custom_call.1} parent=5 // pred_check_branch
        %133 = sbr.rel (%p130) target = $region12
      $region11: #{tpu_custom_call.1} parent=5 // pred_region
        %s134 = ssub.s32 %s12, 1
        // Predicated region
        $region13: #{tpu_custom_call.1} parent=11 // pred_check
          %p135 = pneg %p73
        $region14: #{tpu_custom_call.1} parent=11 // pred_check_branch
          %137 = sbr.rel (%p135) target = $region16
        $region15: #{tpu_custom_call.1} parent=11 // pred_region
          _
        $region16: #{tpu_custom_call.1} parent=11 // pred_fallthru
          _
        // Predicated region
        $region17: #{tpu_custom_call.1} parent=11 // pred_check
          %p138 = pneg %p94
        $region18: #{tpu_custom_call.1} parent=11 // pred_check_branch
          %140 = sbr.rel (%p138) target = $region20
        $region19: #{tpu_custom_call.1} parent=11 // pred_region
          _
        $region20: #{tpu_custom_call.1} parent=11 // pred_fallthru
          _
      $region12: #{tpu_custom_call.1} parent=5 // pred_fallthru
        _
      %p141 = scmp.lt.s32.totalorder %s12, 4
      // Predicated region
      $region21: #{tpu_custom_call.1} parent=5 // pred_check
        %p142 = pneg %p141
      $region22: #{tpu_custom_call.1} parent=5 // pred_check_branch
        %144 = sbr.rel (%p142) target = $region24
      $region23: #{tpu_custom_call.1} parent=5 // pred_region
        // Predicated region
        $region25: #{tpu_custom_call.1} parent=23 // pred_check
          %p145 = pneg %p46
        $region26: #{tpu_custom_call.1} parent=23 // pred_check_branch
          %147 = sbr.rel (%p145) target = $region28
        $region27: #{tpu_custom_call.1} parent=23 // pred_region
          %s148 = sand.u32 %s36, 1
          %s149 = sand.u32 %s36, 1
          %s150 = smul.addr %s149, 64
          %s151 = scalar_lea.vmem [#allocation3], %s150
          %s152 = smul.u32 8, %s19
          %s153 = ssub.s32 13, %s152
          %p154 = scmp.lt.s32.totalorder %s153, 8
          %s155 = scalar_select %p154, %s153, 8
          %s156 = smul.u32 128, %s155
          %p157 = scmp.ne.s32.totalorder 0, %s156
          %s158 = smul.addr %s152, 2
          %s159 = sadd.s32 %s20, %s158
          %s160 = smul.addr %s159, 8
          %s161 = scalar_lea.vmem %s0, %s160
          // Predicated region
          $region29: #{tpu_custom_call.1} parent=27 // pred_check
            %p162 = pneg %p157
          $region30: #{tpu_custom_call.1} parent=27 // pred_check_branch
            %164 = sbr.rel (%p162) target = $region32
          $region31: #{tpu_custom_call.1} parent=27 // pred_region
            // Predicated region
            $region33: #{tpu_custom_call.1} parent=31 // pred_check
              _
            $region34: #{tpu_custom_call.1} parent=31 // pred_check_branch
              %166 = sbr.rel (0) target = $region36
            $region35: #{tpu_custom_call.1} parent=31 // pred_region
              // Predicated region
              $region55: #{tpu_custom_call.1} parent=35 // pred_check
                _
              $region56: #{tpu_custom_call.1} parent=35 // pred_check_branch
                %230 = sbr.rel (0) target = $region58
              $region57: #{tpu_custom_call.1} parent=35 // pred_region
                %s231 = sshrl.u32 %s155, 3
                // While loop
                $region59: #{tpu_custom_call.1} parent=57 // loop_pre_header
                  _
                $region60: #{tpu_custom_call.1} parent=57 // loop_header
                  %s233 = sphi 0, %s235
                  %p234 = scmp.ge.s32.totalorder %s233, %s231
                  %s238 = sphi 0, %s259
                  %s239 = sphi %s161, %s262
                  %s240 = sphi %s151, %s263
                $region61: #{tpu_custom_call.1} parent=57 // loop_header_branch
                  %237 = sbr.rel (%p234) target = $region65
                $region62: #{tpu_custom_call.1} parent=57 // loop_body
                  %v241 = vld [vmem:[%s239] sm:$0xff]
                  %242 = vst [vmem:[%s240] sm:$0xff] %v241
                  %v243 = vld [vmem:[%s239 + $0x10] sm:$0xff]
                  %244 = vst [vmem:[%s240 + $0x8] sm:$0xff] %v243
                  %v245 = vld [vmem:[%s239 + $0x20] sm:$0xff]
                  %246 = vst [vmem:[%s240 + $0x10] sm:$0xff] %v245
                  %v247 = vld [vmem:[%s239 + $0x30] sm:$0xff]
                  %248 = vst [vmem:[%s240 + $0x18] sm:$0xff] %v247
                  %v249 = vld [vmem:[%s239 + $0x40] sm:$0xff]
                  %250 = vst [vmem:[%s240 + $0x20] sm:$0xff] %v249
                  %v251 = vld [vmem:[%s239 + $0x50] sm:$0xff]
                  %252 = vst [vmem:[%s240 + $0x28] sm:$0xff] %v251
                  %v253 = vld [vmem:[%s239 + $0x60] sm:$0xff]
                  %254 = vst [vmem:[%s240 + $0x30] sm:$0xff] %v253
                  %v255 = vld [vmem:[%s239 + $0x70] sm:$0xff]
                  %256 = vst [vmem:[%s240 + $0x38] sm:$0xff] %v255
                  %s257 = sadd.s32 1, %s238
                  %p258 = scmp.ge.s32.totalorder %s257, %s231
                  %s259 = scalar_select %p258, 0, %s257
                  %s260 = smul.u32 %s259, 128
                  %s261 = smul.u32 %s259, 64
                  %s262 = scalar_lea.vmem %s161, %s260
                  %s263 = scalar_lea.vmem %s151, %s261 [#allocation3]
                $region63: #{tpu_custom_call.1} parent=57 // loop_footer
                  %s235 = sadd.s32 %s233, 1
                $region64: #{tpu_custom_call.1} parent=57 // loop_footer_branch
                  %232 = sbr.rel target = $region60
                $region65: #{tpu_custom_call.1} parent=57 // loop_exit
                  _
                %s264 = sshrl.u32 %s155, 3
                %s265 = sand.u32 %s155, 7
                %s266 = smul.u32 %s264, 8
                %s267 = smul.u32 16, %s266
                %s268 = scalar_lea.vmem %s161, %s267
                %s269 = smul.u32 8, %s266
                %s270 = scalar_lea.vmem %s151, %s269 [#allocation3]
                // While loop
                $region66: #{tpu_custom_call.1} parent=57 // loop_pre_header
                  _
                $region67: #{tpu_custom_call.1} parent=57 // loop_header
                  %s272 = sphi 0, %s274
                  %p273 = scmp.ge.s32.totalorder %s272, %s265
                  %s277 = sphi 0, %s284
                  %s278 = sphi %s268, %s287
                  %s279 = sphi %s270, %s288
                $region68: #{tpu_custom_call.1} parent=57 // loop_header_branch
                  %276 = sbr.rel (%p273) target = $region72
                $region69: #{tpu_custom_call.1} parent=57 // loop_body
                  %v280 = vld [vmem:[%s278] sm:$0xff]
                  %281 = vst [vmem:[%s279] sm:$0xff] %v280
                  %s282 = sadd.s32 1, %s277
                  %p283 = scmp.ge.s32.totalorder %s282, %s265
                  %s284 = scalar_select %p283, 0, %s282
                  %s285 = smul.u32 %s284, 16
                  %s286 = smul.u32 %s284, 8
                  %s287 = scalar_lea.vmem %s268, %s285
                  %s288 = scalar_lea.vmem %s270, %s286 [#allocation3]
                $region70: #{tpu_custom_call.1} parent=57 // loop_footer
                  %s274 = sadd.s32 %s272, 1
                $region71: #{tpu_custom_call.1} parent=57 // loop_footer_branch
                  %271 = sbr.rel target = $region67
                $region72: #{tpu_custom_call.1} parent=57 // loop_exit
                  _
              $region58: #{tpu_custom_call.1} parent=35 // pred_fallthru
                _
              // Predicated region
              $region73: #{tpu_custom_call.1} parent=35 // pred_check
                _
              $region74: #{tpu_custom_call.1} parent=35 // pred_check_branch
                %290 = sbr.rel target = $region76
              $region75: #{tpu_custom_call.1} parent=35 // pred_region
                _
              $region76: #{tpu_custom_call.1} parent=35 // pred_fallthru
                _
            $region36: #{tpu_custom_call.1} parent=31 // pred_fallthru
              _
            // Predicated region
            $region37: #{tpu_custom_call.1} parent=31 // pred_check
              _
            $region38: #{tpu_custom_call.1} parent=31 // pred_check_branch
              %168 = sbr.rel target = $region40
            $region39: #{tpu_custom_call.1} parent=31 // pred_region
              %s170 = ssub.s32 256, 1
              %s171 = sshrl.u32 %s155, 3
              // While loop
              $region41: #{tpu_custom_call.1} parent=39 // loop_pre_header
                _
              $region42: #{tpu_custom_call.1} parent=39 // loop_header
                %s173 = sphi 0, %s175
                %p174 = scmp.ge.s32.totalorder %s173, %s171
                %s178 = sphi 0, %s199
                %s179 = sphi %s161, %s202
                %s180 = sphi %s151, %s203
              $region43: #{tpu_custom_call.1} parent=39 // loop_header_branch
                %177 = sbr.rel (%p174) target = $region47
              $region44: #{tpu_custom_call.1} parent=39 // loop_body
                %v181 = vld [vmem:[%s179] sm:%s170]
                %182 = vst [vmem:[%s180] sm:%s170] %v181
                %v183 = vld [vmem:[%s179 + $0x10] sm:%s170]
                %184 = vst [vmem:[%s180 + $0x8] sm:%s170] %v183
                %v185 = vld [vmem:[%s179 + $0x20] sm:%s170]
                %186 = vst [vmem:[%s180 + $0x10] sm:%s170] %v185
                %v187 = vld [vmem:[%s179 + $0x30] sm:%s170]
                %188 = vst [vmem:[%s180 + $0x18] sm:%s170] %v187
                %v189 = vld [vmem:[%s179 + $0x40] sm:%s170]
                %190 = vst [vmem:[%s180 + $0x20] sm:%s170] %v189
                %v191 = vld [vmem:[%s179 + $0x50] sm:%s170]
                %192 = vst [vmem:[%s180 + $0x28] sm:%s170] %v191
                %v193 = vld [vmem:[%s179 + $0x60] sm:%s170]
                %194 = vst [vmem:[%s180 + $0x30] sm:%s170] %v193
                %v195 = vld [vmem:[%s179 + $0x70] sm:%s170]
                %196 = vst [vmem:[%s180 + $0x38] sm:%s170] %v195
                %s197 = sadd.s32 1, %s178
                %p198 = scmp.ge.s32.totalorder %s197, %s171
                %s199 = scalar_select %p198, 0, %s197
                %s200 = smul.u32 %s199, 128
                %s201 = smul.u32 %s199, 64
                %s202 = scalar_lea.vmem %s161, %s200
                %s203 = scalar_lea.vmem %s151, %s201 [#allocation3]
              $region45: #{tpu_custom_call.1} parent=39 // loop_footer
                %s175 = sadd.s32 %s173, 1
              $region46: #{tpu_custom_call.1} parent=39 // loop_footer_branch
                %172 = sbr.rel target = $region42
              $region47: #{tpu_custom_call.1} parent=39 // loop_exit
                _
              %s204 = sshrl.u32 %s155, 3
              %s205 = sand.u32 %s155, 7
              %s206 = smul.u32 %s204, 8
              %s207 = smul.u32 16, %s206
              %s208 = scalar_lea.vmem %s161, %s207
              %s209 = smul.u32 8, %s206
              %s210 = scalar_lea.vmem %s151, %s209 [#allocation3]
              // While loop
              $region48: #{tpu_custom_call.1} parent=39 // loop_pre_header
                _
              $region49: #{tpu_custom_call.1} parent=39 // loop_header
                %s212 = sphi 0, %s214
                %p213 = scmp.ge.s32.totalorder %s212, %s205
                %s217 = sphi 0, %s224
                %s218 = sphi %s208, %s227
                %s219 = sphi %s210, %s228
              $region50: #{tpu_custom_call.1} parent=39 // loop_header_branch
                %216 = sbr.rel (%p213) target = $region54
              $region51: #{tpu_custom_call.1} parent=39 // loop_body
                %v220 = vld [vmem:[%s218] sm:%s170]
                %221 = vst [vmem:[%s219] sm:%s170] %v220
                %s222 = sadd.s32 1, %s217
                %p223 = scmp.ge.s32.totalorder %s222, %s205
                %s224 = scalar_select %p223, 0, %s222
                %s225 = smul.u32 %s224, 16
                %s226 = smul.u32 %s224, 8
                %s227 = scalar_lea.vmem %s208, %s225
                %s228 = scalar_lea.vmem %s210, %s226 [#allocation3]
              $region52: #{tpu_custom_call.1} parent=39 // loop_footer
                %s214 = sadd.s32 %s212, 1
              $region53: #{tpu_custom_call.1} parent=39 // loop_footer_branch
                %211 = sbr.rel target = $region49
              $region54: #{tpu_custom_call.1} parent=39 // loop_exit
                _
            $region40: #{tpu_custom_call.1} parent=31 // pred_fallthru
              _
          $region32: #{tpu_custom_call.1} parent=27 // pred_fallthru
            _
          %291 = vnop
        $region28: #{tpu_custom_call.1} parent=23 // pred_fallthru
          _
      $region24: #{tpu_custom_call.1} parent=5 // pred_fallthru
        _
      %p292 = scmp.le.s32.totalorder 1, %s12
      %p293 = scmp.lt.s32.totalorder %s12, 5
      %p294 = pnand %p292, %p293
      %p295 = pneg %p294
      // Predicated region
      $region77: #{tpu_custom_call.1} parent=5 // pred_check
        _
      $region78: #{tpu_custom_call.1} parent=5 // pred_check_branch
        %297 = sbr.rel (%p294) target = $region80
      $region79: #{tpu_custom_call.1} parent=5 // pred_region
        %s298 = ssub.s32 %s12, 1
        %s299 = sand.u32 %s39, 1
        %s300 = sand.u32 %s39, 1
        %s301 = smul.addr %s300, 64
        %s302 = scalar_lea.vmem [#allocation3], %s301
        // Predicated region
        $region81: #{tpu_custom_call.1} parent=79 // pred_check
          %p303 = pneg %p52
        $region82: #{tpu_custom_call.1} parent=79 // pred_check_branch
          %305 = sbr.rel (%p303) target = $region84
        $region83: #{tpu_custom_call.1} parent=79 // pred_region
          _
        $region84: #{tpu_custom_call.1} parent=79 // pred_fallthru
          _
        %s306 = sand.u32 %s39, 1
        %s307 = sand.u32 %s39, 1
        %s308 = smul.addr %s307, 64
        %s309 = scalar_lea.vmem [#allocation3], %s308
        %p310 = pneg %p52
        %p311 = pneg %p49
        %p312 = pneg %p73
        %p313 = pneg %p70
        %p314 = pneg %p94
        %p315 = pneg %p91
        %p316 = pneg %p120
        %p317 = pneg %p117
        %s318 = sand.u32 %s107, 1
        %s319 = scalar_lea.sflag [#allocation5], %s318
        %s320 = sand.u32 %s107, 1
        %s321 = smul.addr %s320, 8
        %s322 = scalar_lea.vmem [#allocation4], %s321
        %s323 = smul.u32 8, %s21
        %s324 = ssub.s32 13, %s323
        %p325 = scmp.lt.s32.totalorder %s324, 8
        %s326 = scalar_select %p325, %s324, 8
        %s327 = smul.u32 128, %s326
        %p328 = scmp.eq.s32.totalorder %s22, 0
        // Predicated region
        $region85: #{tpu_custom_call.1} parent=79 // pred_check
          %p329 = pneg %p328
        $region86: #{tpu_custom_call.1} parent=79 // pred_check_branch
          %331 = sbr.rel (%p329) target = $region88
        $region87: #{tpu_custom_call.1} parent=79 // pred_region
          %vm332 = vcmask 261120
          %333 = vst.msk [vmem:[#allocation2] sm:$0xff] %vm332, 0.0
        $region88: #{tpu_custom_call.1} parent=79 // pred_fallthru
          _
        %v334 = vld [vmem:[%s302] sm:$0xff]
        %v335 = vld [vmem:[%s302 + $0x8] sm:$0xff]
        %v336 = vld [vmem:[%s302 + $0x10] sm:$0xff]
        %v337 = vld [vmem:[%s302 + $0x18] sm:$0xff]
        %v338 = vld [vmem:[%s302 + $0x20] sm:$0xff]
        %v339 = vld [vmem:[%s302 + $0x28] sm:$0xff]
        %v340 = vld [vmem:[%s302 + $0x30] sm:$0xff]
        %v341 = vld [vmem:[%s302 + $0x38] sm:$0xff]
        %v342 = vlaneseq
        %v343 = vshrl.u32 %v342, 7
        %s344 = smul.u32 %s22, 8
        %v345 = vstv %s344
        %v346 = vadd.s32 %v343, %v345
        %vm347 = vcmp.lt.s32.totalorder %v346, 12
        %v348 = vsel %vm347, 1, 0
        %vm349 = vcmp.eq.s32.totalorder %v348, 1
        %v350 = vsel %vm349, %v334, 0.0
        %v351 = vsel %vm349, %v335, 0.0
        %v352 = vsel %vm349, %v336, 0.0
        %v353 = vsel %vm349, %v337, 0.0
        %v354 = vsel %vm349, %v338, 0.0
        %v355 = vsel %vm349, %v339, 0.0
        %v356 = vsel %vm349, %v340, 0.0
        %v357 = vsel %vm349, %v341, 0.0
        %v358 = vld [vmem:[#allocation2] sm:$0xff]
        %vm359 = vcmask 261120
        %v360 = vsel %vm359, %v350, 0.0
        %v361 = vrot.slane %v360, 4
        %v362 = vadd.f32 %v360, %v361
        %v363 = vrot.slane %v362, 2
        %v364 = vadd.f32 %v362, %v363
        %v365 = vrot.slane %v364, 1
        %v366 = vadd.f32 %v364, %v365
        %v367 = vsel %vm359, %v351, 0.0
        %v368 = vrot.slane %v367, 4
        %v369 = vadd.f32 %v367, %v368
        %v370 = vrot.slane %v369, 2
        %v371 = vadd.f32 %v369, %v370
        %v372 = vrot.slane %v371, 1
        %v373 = vadd.f32 %v371, %v372
        %v374 = vsel %vm359, %v352, 0.0
        %v375 = vrot.slane %v374, 4
        %v376 = vadd.f32 %v374, %v375
        %v377 = vrot.slane %v376, 2
        %v378 = vadd.f32 %v376, %v377
        %v379 = vrot.slane %v378, 1
        %v380 = vadd.f32 %v378, %v379
        %v381 = vsel %vm359, %v353, 0.0
        %v382 = vrot.slane %v381, 4
        %v383 = vadd.f32 %v381, %v382
        %v384 = vrot.slane %v383, 2
        %v385 = vadd.f32 %v383, %v384
        %v386 = vrot.slane %v385, 1
        %v387 = vadd.f32 %v385, %v386
        %v388 = vsel %vm359, %v354, 0.0
        %v389 = vrot.slane %v388, 4
        %v390 = vadd.f32 %v388, %v389
        %v391 = vrot.slane %v390, 2
        %v392 = vadd.f32 %v390, %v391
        %v393 = vrot.slane %v392, 1
        %v394 = vadd.f32 %v392, %v393
        %v395 = vsel %vm359, %v355, 0.0
        %v396 = vrot.slane %v395, 4
        %v397 = vadd.f32 %v395, %v396
        %v398 = vrot.slane %v397, 2
        %v399 = vadd.f32 %v397, %v398
        %v400 = vrot.slane %v399, 1
        %v401 = vadd.f32 %v399, %v400
        %v402 = vsel %vm359, %v356, 0.0
        %v403 = vrot.slane %v402, 4
        %v404 = vadd.f32 %v402, %v403
        %v405 = vrot.slane %v404, 2
        %v406 = vadd.f32 %v404, %v405
        %v407 = vrot.slane %v406, 1
        %v408 = vadd.f32 %v406, %v407
        %v409 = vsel %vm359, %v357, 0.0
        %v410 = vrot.slane %v409, 4
        %v411 = vadd.f32 %v409, %v410
        %v412 = vrot.slane %v411, 2
        %v413 = vadd.f32 %v411, %v412
        %v414 = vrot.slane %v413, 1
        %v415 = vadd.f32 %v413, %v414
        %vm424 = vcmask 1041409
        %v425 = vsel %vm424, %v373, %v366
        %vm426 = vcmask 1042434
        %v427 = vsel %vm426, %v380, %v425
        %vm428 = vcmask 1043459
        %v429 = vsel %vm428, %v387, %v427
        %vm430 = vcmask 1044484
        %v431 = vsel %vm430, %v394, %v429
        %vm432 = vcmask 1045509
        %v433 = vsel %vm432, %v401, %v431
        %vm434 = vcmask 1046534
        %v435 = vsel %vm434, %v408, %v433
        %vm436 = vcmask 1047559
        %v437 = vsel %vm436, %v415, %v435
        %v439 = vadd.f32 %v358, %v437
        %440 = vst.msk [vmem:[#allocation2] sm:$0xff] %vm359, %v439
        %p441 = scmp.eq.s32.totalorder %s22, 1
        // Predicated region
        $region89: #{tpu_custom_call.1} parent=79 // pred_check
          %p442 = pneg %p441
        $region90: #{tpu_custom_call.1} parent=79 // pred_check_branch
          %444 = sbr.rel (%p442) target = $region92
        $region91: #{tpu_custom_call.1} parent=79 // pred_region
          %v445 = vld [vmem:[#allocation2] sm:$0xff]
          %v446 = vld [vmem:[%s1] sm:$0xff]
          %v447 = vld [vmem:[%s1 + $0x8] sm:$0xff]
          %v448 = vld [vmem:[%s1 + $0x10] sm:$0xff]
          %v449 = vld [vmem:[%s1 + $0x18] sm:$0xff]
          %v450 = vld [vmem:[%s2] sm:$0x1]
          %v452 = vlaneseq
          %v453 = vshrl.u32 %v452, 7
          %v454 = vsub.s32 0, %v453
          %v455 = vrot.slane %v450, %v454
          %v458 = vsel %vm359, %v445, 0
          %460 = vmatprep.subr.mxu0 0.0
          %461 = vmatpush1.msra.mxu0 0.0
          %462 = vmatprep.subr.mxu0 0.0
          %463 = vmatpush1.msra.mxu0 0.0
          %464 = vmatprep.subr.mxu0 0.0
          %465 = vmatpush1.msra.mxu0 0.0
          %466 = vmatprep.subr.mxu0 0.0
          %467 = vmatpush1.msra.mxu0 0.0
          %468 = vmatprep.subr.mxu0 0.0
          %469 = vmatpush1.msra.mxu0 0.0
          %470 = vmatprep.subr.mxu0 0.0
          %471 = vmatpush1.msra.mxu0 0.0
          %472 = vmatprep.subr.mxu0 0.0
          %473 = vmatpush1.msra.mxu0 0.0
          %474 = vmatprep.subr.mxu0 0.0
          %475 = vmatpush1.msra.mxu0 0.0
          %476 = vmatprep.subr.mxu0 0.0
          %477 = vmatpush1.msra.mxu0 0.0
          %478 = vmatprep.subr.mxu0 0.0
          %479 = vmatpush1.msra.mxu0 0.0
          %480 = vmatprep.subr.mxu0 0.0
          %481 = vmatpush1.msra.mxu0 0.0
          %482 = vmatprep.subr.mxu0 0.0
          %483 = vmatpush1.msra.mxu0 0.0
          %484 = vmatprep.subr.mxu0 0.0
          %485 = vmatpush1.msra.mxu0 %v449
          %486 = vmatprep.subr.mxu0 0.0
          %487 = vmatpush1.msra.mxu0 %v448
          %488 = vmatprep.subr.mxu0 0.0
          %489 = vmatpush1.msra.mxu0 %v447
          %490 = vmatprep.subr.mxu0 0.0
          %491 = vmatpush1.msra.mxu0 %v446
          %492 = vmatprep.subr.mxu0 0.0
          %493 = vmatpush2.msra.mxu0 0.0
          %494 = vmatprep.subr.mxu0 0.0
          %495 = vmatpush2.msra.mxu0 0.0
          %496 = vmatprep.subr.mxu0 0.0
          %497 = vmatpush2.msra.mxu0 0.0
          %498 = vmatprep.subr.mxu0 0.0
          %499 = vmatpush2.msra.mxu0 0.0
          %500 = vmatprep.subr.mxu0 0.0
          %501 = vmatpush2.msra.mxu0 0.0
          %502 = vmatprep.subr.mxu0 0.0
          %503 = vmatpush2.msra.mxu0 0.0
          %504 = vmatprep.subr.mxu0 0.0
          %505 = vmatpush2.msra.mxu0 0.0
          %506 = vmatprep.subr.mxu0 0.0
          %507 = vmatpush2.msra.mxu0 0.0
          %508 = vmatprep.subr.mxu0 0.0
          %509 = vmatpush2.msra.mxu0 0.0
          %510 = vmatprep.subr.mxu0 0.0
          %511 = vmatpush2.msra.mxu0 0.0
          %512 = vmatprep.subr.mxu0 0.0
          %513 = vmatpush2.msra.mxu0 0.0
          %514 = vmatprep.subr.mxu0 0.0
          %515 = vmatpush2.msra.mxu0 0.0
          %516 = vmatprep.subr.mxu0 0.0
          %517 = vmatpush2.msra.mxu0 0.0
          %518 = vmatprep.subr.mxu0 0.0
          %519 = vmatpush2.msra.mxu0 0.0
          %520 = vmatprep.subr.mxu0 0.0
          %521 = vmatpush2.msra.mxu0 0.0
          %522 = vmatprep.subr.mxu0 0.0
          %523 = vmatpush2.msra.mxu0 0.0
          %524 = vmatprep.mubr.f32.mxu0 0.0
          %525 = vmatmul.mubr.f32.gmra.mxu0 %v458
          %v526 = vpop.f32.mrf.mxu0
          %v527 = vadd.f32 %v455, %v526
          %v528 = vpop.f32.mrf.mxu0
          %529 = vdwg.mxu0
          %v530 = vmax.f32 %v527, 0.0
          %vm531 = vcmask 130048
          %532 = vst.msk [vmem:[%s322] sm:$0xff] %vm531, %v530
        $region92: #{tpu_custom_call.1} parent=79 // pred_fallthru
          _
        %s533 = sand.u32 %s107, 1
        %s534 = scalar_lea.sflag [#allocation5], %s533
        %s535 = sand.u32 %s107, 1
        %s536 = smul.addr %s535, 8
        %s537 = scalar_lea.vmem [#allocation4], %s536
        // Predicated region
        $region93: #{tpu_custom_call.1} parent=79 // pred_check
          %p538 = pneg %p117
        $region94: #{tpu_custom_call.1} parent=79 // pred_check_branch
          %540 = sbr.rel (%p538) target = $region96
        $region95: #{tpu_custom_call.1} parent=79 // pred_region
          %s542 = ssub.s32 128, 128
          %543 = vsyncadd %s534, %s542
          %s544 = smul.addr %s21, 128
          %s545 = scalar_lea.hbm %s3, %s544
          %s547 = sshll.u32 %s537, 4
          %s548 = int_to_ptr.vmem [resolvable:$true] %s547
          %550 = dma.vmem_to_hbm [thread:$0]  %s548, 128, %s545, %s534
        $region96: #{tpu_custom_call.1} parent=79 // pred_fallthru
          _
      $region80: #{tpu_custom_call.1} parent=5 // pred_fallthru
        _
      %p551 = scmp.le.s32.totalorder 2, %s12
      // Predicated region
      $region97: #{tpu_custom_call.1} parent=5 // pred_check
        %p552 = pneg %p551
      $region98: #{tpu_custom_call.1} parent=5 // pred_check_branch
        %554 = sbr.rel (%p552) target = $region100
      $region99: #{tpu_custom_call.1} parent=5 // pred_region
        %s555 = ssub.s32 %s12, 2
        // Predicated region
        $region101: #{tpu_custom_call.1} parent=99 // pred_check
          %p556 = pneg %p123
        $region102: #{tpu_custom_call.1} parent=99 // pred_check_branch
          %558 = sbr.rel (%p556) target = $region104
        $region103: #{tpu_custom_call.1} parent=99 // pred_region
          %s559 = sand.u32 %s108, 1
          %s560 = scalar_lea.sflag [#allocation5], %s559
          %s561 = sand.u32 %s108, 1
          %s562 = smul.addr %s561, 8
          %s563 = scalar_lea.vmem [#allocation4], %s562
          %564 = dma.done %s560, 128
        $region104: #{tpu_custom_call.1} parent=99 // pred_fallthru
          _
      $region100: #{tpu_custom_call.1} parent=5 // pred_fallthru
        _
    $region6: #{tpu_custom_call.1} parent=1 // loop_footer
      %s16 = sadd.s32 1, %s12
    $region7: #{tpu_custom_call.1} parent=1 // loop_footer_branch
      %11 = sbr.rel target = $region3
    $region8: #{tpu_custom_call.1} parent=1 // loop_exit
      _
    %565 = vsyncpa [#allocation5], 1
    %s566 = scalar_lea.sflag [#allocation5], 1
    %567 = vsyncpa %s566, 1

</llo_original>
